<compile_context>
chip_gen: v5e
topology: v5e:2x2
jax: 0.10.0
libtpu: 0.0.40
codegen_flags: <defaults>
</compile_context>

<pallas_src>
import numpy as np

import jax
import jax.numpy as jnp
from jax.experimental import pallas as pl
from jax.experimental.pallas import tpu as pltpu

T_PAD = 128        # padded number of tokens (lane axis); hard cap per example
NO_LABEL_IDX = 0   # "NoLabel" is inserted at vocab position 0 in __init__


def _slot_label_kernel(n_ref, ts_ref, te_ref, ss_ref, se_ref, sl_ref, out_ref):
    b = pl.program_id(0)
    n_slot = n_ref[b]                    # scalar: #valid slots for this example

    ts = ts_ref[0]                       # (1, T_PAD)  token start offsets
    te = te_ref[0]                       # (1, T_PAD)  token end offsets
    ss = ss_ref[0]                       # (S_PAD, 1)  slot start offsets
    se = se_ref[0]                       # (S_PAD, 1)  slot end offsets
    sl = sl_ref[0]                       # (S_PAD, 1)  slot label vocab ids

    s_pad = ss.shape[0]

    sidx = jax.lax.broadcasted_iota(jnp.int32, (s_pad, 1), 0)
    valid_slot = sidx < n_slot                                      # (S_PAD, 1)

    # Vectorized two-pointer walk: for token t, the "current" slot is the first
    # valid slot whose end >= start[t]  (slots with end < start[t] consumed).
    consumed = jnp.logical_and(se < ts, valid_slot)                 # (S_PAD, T_PAD)
    count = jnp.sum(consumed.astype(jnp.int32), axis=0,
                    keepdims=True)                                  # (1, T_PAD)

    # Fused one-hot gather + overlap test + NO_LABEL fallback:
    # the single selected (valid, overlapping) slot contributes its label id,
    # everything else contributes 0 == NO_LABEL_IDX.  Padded slots have
    # sl == 0, so the "slots exhausted" case also falls out to NO_LABEL.
    one_hot = (sidx == count)                                       # (S_PAD, T_PAD)
    hit = jnp.logical_and(jnp.logical_and(one_hot, valid_slot), te > ss)
    label = jnp.sum(jnp.where(hit, sl, 0), axis=0, keepdims=True)   # (1, T_PAD)

    out_ref[0] = label.astype(jnp.int32)


@jax.jit
def _slot_labels_batched(n_slots, tok_start, tok_end,
                         slot_start, slot_end, slot_label):
    """Padded batched arrays -> (B, T_PAD) int32 slot-label ids."""
    B, _, t_pad = tok_start.shape
    _, s_pad, _ = slot_start.shape

    tok_spec = pl.BlockSpec((1, 1, t_pad), lambda b, n: (b, 0, 0))
    slot_spec = pl.BlockSpec((1, s_pad, 1), lambda b, n: (b, 0, 0))

    out = pl.pallas_call(
        _slot_label_kernel,
        out_shape=jax.ShapeDtypeStruct((B, 1, t_pad), jnp.int32),
        grid_spec=pltpu.PrefetchScalarGridSpec(
            num_scalar_prefetch=1,
            grid=(B,),
            in_specs=[tok_spec, tok_spec, slot_spec, slot_spec, slot_spec],
            out_specs=pl.BlockSpec((1, 1, t_pad), lambda b, n: (b, 0, 0)),
        ),
        compiler_params=pltpu.CompilerParams(
            dimension_semantics=("parallel",)),
    )(n_slots, tok_start, tok_end, slot_start, slot_end, slot_label)
    return out[:, 0, :]


class SlotLabelTransformPallas:
    """Python glue mirroring SlotLabelTransform.__init__/process_slots/forward."""

    NO_LABEL = "NoLabel"
    PAD = "__PAD__"
    UNK = "__UNKNOWN__"

    def __init__(self, poss_slots):
        poss_slots = list(poss_slots)
        if self.NO_LABEL not in poss_slots:
            poss_slots.insert(0, self.NO_LABEL)
        if self.PAD not in poss_slots:
            poss_slots.insert(1, self.PAD)
        if self.UNK not in poss_slots:
            poss_slots.insert(2, self.UNK)
        # deterministic "parameter": the label vocabulary
        self.vocab = {tok: i for i, tok in enumerate(poss_slots)}
        self.unk_idx = self.vocab[self.UNK]
        # The fused kernel relies on NoLabel living at vocab index 0 and on
        # zero-padded slot arrays encoding "no slot".
        assert self.vocab[self.NO_LABEL] == NO_LABEL_IDX == 0, (
            "SlotLabelTransformPallas requires NoLabel at vocab index 0")

    # --- string parsing (no Pallas equivalent; stays on host) ---------------
    def process_slots(self, slots_list: str):
        if "," in slots_list:
            slots_list = slots_list.split(",")
        elif slots_list != "":
            slots_list = [slots_list]
        else:
            return []
        slots = []
        for curr_slot in slots_list:
            first = curr_slot.find(":")
            second = curr_slot.find(":", first + 1)
            start_ind = int(curr_slot[0:first])
            end_ind = int(curr_slot[first + 1:second])
            slot_name = curr_slot[second + 1:]
            slots.append((slot_name, start_ind, end_ind))
        return slots

    # --- batched forward: one kernel launch for the whole batch -------------
    def forward_batch(self, batch):
        """batch: list of (tok_info_dict, slots_str). Returns list of dicts."""
        B = len(batch)
        parsed = []
        max_slots = 0
        for tok_info, slots_str in batch:
            n_tok = len(tok_info["start"])
            if n_tok > T_PAD:
                raise ValueError(
                    f"num_tokens={n_tok} exceeds T_PAD={T_PAD}; "
                    "increase T_PAD or tile the token axis")
            slots = self.process_slots(slots_str)
            parsed.append((tok_info, slots))
            max_slots = max(max_slots, len(slots))

        # Slots sit on the sublane axis -> pad to a multiple of 8 only.
        s_pad = max(8, -(-max_slots // 8) * 8)

        # Host-side numpy packing: one padded batch, one device transfer.
        tok_start = np.zeros((B, 1, T_PAD), np.int32)
        tok_end = np.zeros((B, 1, T_PAD), np.int32)
        slot_start = np.zeros((B, s_pad, 1), np.int32)
        slot_end = np.zeros((B, s_pad, 1), np.int32)
        slot_lab = np.zeros((B, s_pad, 1), np.int32)
        n_slots = np.zeros((B,), np.int32)
        n_tokens = []
        for i, (tok_info, slots) in enumerate(parsed):
            st = np.asarray(tok_info["start"], np.int32)
            en = np.asarray(tok_info["end"], np.int32)
            n_tokens.append(st.shape[0])
            tok_start[i, 0, :st.shape[0]] = st
            tok_end[i, 0, :en.shape[0]] = en
            n_slots[i] = len(slots)
            for j, (name, s, e) in enumerate(slots):
                slot_start[i, j, 0] = s
                slot_end[i, j, 0] = e
                slot_lab[i, j, 0] = self.vocab.get(name, self.unk_idx)

        out = _slot_labels_batched(
            jnp.asarray(n_slots), jnp.asarray(tok_start), jnp.asarray(tok_end),
            jnp.asarray(slot_start), jnp.asarray(slot_end), jnp.asarray(slot_lab))
        out = jax.block_until_ready(out)
        return [{"slot_labels": out[i, :n_tokens[i]]} for i in range(B)]

    def __call__(self, text_and_slots):
        return self.forward_batch([text_and_slots])[0]


def _reference_forward(tokens, start, end, slots, vocab, no_label, unk_idx):
    """Direct Python port of the PyTorch forward loop (ground truth)."""
    curr_slot_i = 0
    curr_token_i = 0
    slot_labels = []
    while curr_token_i < len(tokens) and curr_slot_i < len(slots):
        name, s, e = slots[curr_slot_i]
        if int(start[curr_token_i]) > e:
            curr_slot_i += 1
        else:
            if int(end[curr_token_i]) > s:
                slot_labels.append(name)
            else:
                slot_labels.append(no_label)
            curr_token_i += 1
    slot_labels += [no_label] * (len(tokens) - curr_token_i)
    return [vocab.get(l, unk_idx) for l in slot_labels]


def _make_example(key, num_tokens):
    """Deterministic synthetic tokenization: random lengths, 1-char gaps."""
    lengths = [int(v) for v in jax.random.randint(key, (num_tokens,), 1, 6)]
    starts, ends, pos = [], [], 0
    for L in lengths:
        starts.append(pos)
        ends.append(pos + L)
        pos += L + 1
    tokens = [f"tok{i}" for i in range(num_tokens)]
    return tokens, starts, ends


if __name__ == "__main__":
    key = jax.random.PRNGKey(0)
    k0, k1, k2 = jax.random.split(key, 3)

    transform = SlotLabelTransformPallas(["slot_a", "slot_b", "slot_c"])

    # Example 0: two known slots (spans tokens 1-2 and token 5).
    tok0, st0, en0 = _make_example(k0, 8)
    slots0 = f"{st0[1]}:{en0[2]}:slot_a,{st0[5]}:{en0[5]}:slot_b"
    # Example 1: one known slot on token 0 and one UNKNOWN slot on tokens 3-4.
    tok1, st1, en1 = _make_example(k1, 5)
    slots1 = f"{st1[0]}:{en1[0]}:slot_c,{st1[3]}:{en1[4]}:slot_zzz"
    # Example 2: empty slot string.
    tok2, st2, en2 = _make_example(k2, 12)
    slots2 = ""

    batch = [
        ({"tokens": tok0, "start": st0, "end": en0}, slots0),
        ({"tokens": tok1, "start": st1, "end": en1}, slots1),
        ({"tokens": tok2, "start": st2, "end": en2}, slots2),
    ]

    outs = transform.forward_batch(batch)

    ok = True
    for (tok_info, slots_str), out in zip(batch, outs):
        ref = _reference_forward(
            tok_info["tokens"], tok_info["start"], tok_info["end"],
            transform.process_slots(slots_str),
            transform.vocab, transform.NO_LABEL, transform.unk_idx)
        got = [int(v) for v in out["slot_labels"]]
        assert got == ref, (got, ref)
        ok = ok and (got == ref)

    # Also exercise the single-example path (wraps the batched kernel).
    single = transform(batch[0])
    jax.block_until_ready(single["slot_labels"])

    if ok:
        print("KERNEL_OK")
</pallas_src>

<mosaic_0001>
module attributes {stable_mosaic.version = 11 : i64} {
  func.func @_slot_label_kernel(%arg0: i32, %arg1: memref<3xi32, #tpu.memory_space<smem>>, %arg2: memref<1x1x128xi32, #tpu.memory_space<vmem>>, %arg3: memref<1x1x128xi32, #tpu.memory_space<vmem>>, %arg4: memref<1x8x1xi32, #tpu.memory_space<vmem>>, %arg5: memref<1x8x1xi32, #tpu.memory_space<vmem>>, %arg6: memref<1x8x1xi32, #tpu.memory_space<vmem>>, %arg7: memref<1x1x128xi32, #tpu.memory_space<vmem>>) attributes {dimension_semantics = [#tpu.dimension_semantics<parallel>], iteration_bounds = array<i64: 3>, scalar_prefetch = 1 : i64, scratch_operands = 0 : i64, tpu.core_type = #tpu.core_type<tc>, window_params = [{transform_indices = @transform_0, window_bounds = array<i64: 1, 1, 128>}, {transform_indices = @transform_1, window_bounds = array<i64: 1, 1, 128>}, {transform_indices = @transform_2, window_bounds = array<i64: 1, 8, 1>}, {transform_indices = @transform_3, window_bounds = array<i64: 1, 8, 1>}, {transform_indices = @transform_4, window_bounds = array<i64: 1, 8, 1>}, {transform_indices = @transform_5, window_bounds = array<i64: 1, 1, 128>}]} {
    %0 = arith.index_cast %arg0 : i32 to index
    %1 = memref.load %arg1[%0] : memref<3xi32, #tpu.memory_space<smem>>
    %c0 = arith.constant 0 : index
    %c0_0 = arith.constant 0 : index
    %c0_1 = arith.constant 0 : index
    %2 = vector.load %arg2[%c0, %c0_0, %c0_1] : memref<1x1x128xi32, #tpu.memory_space<vmem>>, vector<1x1x128xi32>
    %3 = vector.shape_cast %2 : vector<1x1x128xi32> to vector<1x128xi32>
    %c0_2 = arith.constant 0 : index
    %c0_3 = arith.constant 0 : index
    %c0_4 = arith.constant 0 : index
    %4 = vector.load %arg3[%c0_2, %c0_3, %c0_4] : memref<1x1x128xi32, #tpu.memory_space<vmem>>, vector<1x1x128xi32>
    %5 = vector.shape_cast %4 : vector<1x1x128xi32> to vector<1x128xi32>
    %c0_5 = arith.constant 0 : index
    %c0_6 = arith.constant 0 : index
    %c0_7 = arith.constant 0 : index
    %6 = vector.load %arg4[%c0_5, %c0_6, %c0_7] : memref<1x8x1xi32, #tpu.memory_space<vmem>>, vector<1x8x1xi32>
    %7 = vector.shape_cast %6 : vector<1x8x1xi32> to vector<8x1xi32>
    %c0_8 = arith.constant 0 : index
    %c0_9 = arith.constant 0 : index
    %c0_10 = arith.constant 0 : index
    %8 = vector.load %arg5[%c0_8, %c0_9, %c0_10] : memref<1x8x1xi32, #tpu.memory_space<vmem>>, vector<1x8x1xi32>
    %9 = vector.shape_cast %8 : vector<1x8x1xi32> to vector<8x1xi32>
    %c0_11 = arith.constant 0 : index
    %c0_12 = arith.constant 0 : index
    %c0_13 = arith.constant 0 : index
    %10 = vector.load %arg6[%c0_11, %c0_12, %c0_13] : memref<1x8x1xi32, #tpu.memory_space<vmem>>, vector<1x8x1xi32>
    %11 = vector.shape_cast %10 : vector<1x8x1xi32> to vector<8x1xi32>
    %12 = tpu.iota {dimensions = array<i32: 0>} : vector<8x1xi32>
    %13 = vector.broadcast %1 : i32 to vector<8x1xi32>
    %14 = arith.cmpi slt, %12, %13 : vector<8x1xi32>
    %15 = vector.broadcast %9 : vector<8x1xi32> to vector<8x128xi32>
    %16 = vector.broadcast %3 : vector<1x128xi32> to vector<8x128xi32>
    %17 = arith.cmpi slt, %15, %16 : vector<8x128xi32>
    %18 = vector.broadcast %14 : vector<8x1xi1> to vector<8x128xi1>
    %19 = arith.andi %17, %18 : vector<8x128xi1>
    %20 = arith.extui %19 : vector<8x128xi1> to vector<8x128xi32>
    %cst = arith.constant dense<0> : vector<128xi32>
    %21 = vector.multi_reduction <add>, %20, %cst [0] : vector<8x128xi32> to vector<128xi32>
    %22 = vector.shape_cast %21 : vector<128xi32> to vector<1x128xi32>
    %23 = vector.broadcast %12 : vector<8x1xi32> to vector<8x128xi32>
    %24 = vector.broadcast %22 : vector<1x128xi32> to vector<8x128xi32>
    %25 = arith.cmpi eq, %23, %24 : vector<8x128xi32>
    %26 = vector.broadcast %14 : vector<8x1xi1> to vector<8x128xi1>
    %27 = arith.andi %25, %26 : vector<8x128xi1>
    %28 = vector.broadcast %5 : vector<1x128xi32> to vector<8x128xi32>
    %29 = vector.broadcast %7 : vector<8x1xi32> to vector<8x128xi32>
    %30 = arith.cmpi sgt, %28, %29 : vector<8x128xi32>
    %31 = arith.andi %27, %30 : vector<8x128xi1>
    %c0_i32 = arith.constant 0 : i32
    %32 = vector.shape_cast %11 : vector<8x1xi32> to vector<8x1xi32>
    %33 = vector.broadcast %32 : vector<8x1xi32> to vector<8x128xi32>
    %34 = vector.broadcast %c0_i32 : i32 to vector<8x128xi32>
    %35 = arith.select %31, %33, %34 : vector<8x128xi1>, vector<8x128xi32>
    %cst_14 = arith.constant dense<0> : vector<128xi32>
    %36 = vector.multi_reduction <add>, %35, %cst_14 [0] : vector<8x128xi32> to vector<128xi32>
    %37 = vector.shape_cast %36 : vector<128xi32> to vector<1x128xi32>
    %c0_15 = arith.constant 0 : index
    %c0_16 = arith.constant 0 : index
    %c0_17 = arith.constant 0 : index
    %38 = vector.load %arg7[%c0_15, %c0_16, %c0_17] : memref<1x1x128xi32, #tpu.memory_space<vmem>>, vector<1x1x128xi32>
    %39 = vector.shape_cast %38 : vector<1x1x128xi32> to vector<1x128xi32>
    %40 = vector.shape_cast %37 : vector<1x128xi32> to vector<1x1x128xi32>
    tpu.vector_store %arg7[%c0_15, %c0_16, %c0_17], %40 {strides = array<i32>} : memref<1x1x128xi32, #tpu.memory_space<vmem>>, vector<1x1x128xi32>,
    return
  }
  func.func @transform_0(%arg0: i32, %arg1: memref<3xi32, #tpu.memory_space<smem>>) -> (i32, i32, i32) {
    %c0_i32 = arith.constant 0 : i32
    %c0_i32_0 = arith.constant 0 : i32
    %c0_i32_1 = arith.constant 0 : i32
    return %arg0, %c0_i32, %c0_i32_0 : i32, i32, i32
  }
  func.func @transform_1(%arg0: i32, %arg1: memref<3xi32, #tpu.memory_space<smem>>) -> (i32, i32, i32) {
    %c0_i32 = arith.constant 0 : i32
    %c0_i32_0 = arith.constant 0 : i32
    %c0_i32_1 = arith.constant 0 : i32
    return %arg0, %c0_i32, %c0_i32_0 : i32, i32, i32
  }
  func.func @transform_2(%arg0: i32, %arg1: memref<3xi32, #tpu.memory_space<smem>>) -> (i32, i32, i32) {
    %c0_i32 = arith.constant 0 : i32
    %c0_i32_0 = arith.constant 0 : i32
    %c0_i32_1 = arith.constant 0 : i32
    return %arg0, %c0_i32, %c0_i32_0 : i32, i32, i32
  }
  func.func @transform_3(%arg0: i32, %arg1: memref<3xi32, #tpu.memory_space<smem>>) -> (i32, i32, i32) {
    %c0_i32 = arith.constant 0 : i32
    %c0_i32_0 = arith.constant 0 : i32
    %c0_i32_1 = arith.constant 0 : i32
    return %arg0, %c0_i32, %c0_i32_0 : i32, i32, i32
  }
  func.func @transform_4(%arg0: i32, %arg1: memref<3xi32, #tpu.memory_space<smem>>) -> (i32, i32, i32) {
    %c0_i32 = arith.constant 0 : i32
    %c0_i32_0 = arith.constant 0 : i32
    %c0_i32_1 = arith.constant 0 : i32
    return %arg0, %c0_i32, %c0_i32_0 : i32, i32, i32
  }
  func.func @transform_5(%arg0: i32, %arg1: memref<3xi32, #tpu.memory_space<smem>>) -> (i32, i32, i32) {
    %c0_i32 = arith.constant 0 : i32
    %c0_i32_0 = arith.constant 0 : i32
    %c0_i32_1 = arith.constant 0 : i32
    return %arg0, %c0_i32, %c0_i32_0 : i32, i32, i32
  }
}

</mosaic_0001>

<llo_original>
// kernel: _slot_labels_batched.1
$region0: #{_slot_labels_batched.1}
  #allocation0 [shape = 'u32[]', space=smem, size = 0x4, offset = 0x4, fixed_abs, tag = 'smem constant byte address 0x4 - core index']
  #allocation1 [shape = 'u32[72,128]{1,0:T(1,128)}', space=vmem, size = 0x9000, scoped, tag = 'internal scratch']
  #allocation2 [shape = 's32[1]{0}', space=sflag, size = 0x4, scoped, tag = 'scoped memory for _slot_labels_batched.1']
  #allocation3 [shape = 'u8[512]{0}', space=smem, size = 0x200, scoped, tag = 'prefetched SMEM operand 0']
  %s0 = inlined_call_operand.vmem [shape: s32[3], index: 0, kind: input, shape index: {}]
  %s1 = inlined_call_operand.vmem [shape: s32[3,1,128], index: 1, kind: input, shape index: {}]
  %s2 = inlined_call_operand.vmem [shape: s32[3,1,128], index: 2, kind: input, shape index: {}]
  %s3 = inlined_call_operand.vmem [shape: s32[3,8,1], index: 3, kind: input, shape index: {}]
  %s4 = inlined_call_operand.vmem [shape: s32[3,8,1], index: 4, kind: input, shape index: {}]
  %s5 = inlined_call_operand.vmem [shape: s32[3,8,1], index: 5, kind: input, shape index: {}]
  %s6 = inlined_call_operand.vmem [shape: s32[3,1,128], index: 6, kind: output, shape index: {}]
  %s7 = sld [smem:[#allocation0]]
  $region53: #{_slot_labels_batched.1} parent=0
    _
  %s9 = ssub.s32 1, %s7
  %s10 = scalar_select 0, %s9, %s7
  %s12 = sshll.u32 %s0, 4
  %s13 = int_to_ptr.vmem [resolvable:$true] %s12
  %15 = dma.vmem_to_smem %s13, 16, [#allocation3], [#allocation2]
  %17 = dma.done [#allocation2], 16
  %18 = sfence
  loop: start=0, step=1, limit=5
  $region2: #{_slot_labels_batched.1} parent=0 // loop_pre_header
    _
  $region3: #{_slot_labels_batched.1} parent=0 // loop_header
    %s20 = sphi 0, %s24
    %p21 = scmp.ge.s32.totalorder %s20, 5
    %s30 = sphi 0, %s32
    %s33 = sphi 0, %s30
    %s34 = sphi 0, %s33
    %s50 = sphi 0, %s34
    %s56 = sphi 0, %s58
    %s59 = sphi 0, %s56
    %s60 = sphi 0, %s59
    %s76 = sphi 0, %s60
    %s82 = sphi 0, %s84
    %s85 = sphi 0, %s82
    %s86 = sphi 0, %s85
    %s102 = sphi 0, %s86
    %s108 = sphi 0, %s110
    %s111 = sphi 0, %s108
    %s112 = sphi 0, %s111
    %s128 = sphi 0, %s112
    %s134 = sphi 0, %s136
    %s137 = sphi 0, %s134
    %s138 = sphi 0, %s137
    %s154 = sphi 0, %s138
    %s160 = sphi 0, %s162
    %s163 = sphi 0, %s160
    %s164 = sphi 0, %s163
    %s180 = sphi 0, %s164
  $region4: #{_slot_labels_batched.1} parent=0 // loop_header_branch
    %23 = sbr.rel (%p21) target = $region8
  $region5: #{_slot_labels_batched.1} parent=0 // loop_body
    %s25 = ssub.s32 %s20, 1
    %s26 = ssub.s32 %s20, 2
    %s27 = sadd.s32 %s20, 1
    %s28 = ssub.s32 %s20, %s27
    %p29 = scmp.eq.s32.totalorder %s28, 0
    %s31 = sadd.s32 %s30, 1
    %s32 = scalar_select %p29, %s30, %s31
    %p35 = pneg %p29
    %p36 = scmp.eq.s32.totalorder %s20, 2
    %p37 = por %p35, %p36
    %p38 = scmp.ne.s32.totalorder %s30, %s33
    %p39 = scmp.eq.s32.totalorder %s20, 0
    %p40 = por %p38, %p39
    %p41 = scmp.ne.s32.totalorder %s30, %s33
    %p42 = scmp.eq.s32.totalorder %s25, 2
    %p43 = por %p41, %p42
    %p44 = scmp.ne.s32.totalorder %s33, %s34
    %p45 = scmp.eq.s32.totalorder %s25, 0
    %p46 = por %p44, %p45
    %p47 = scmp.ne.s32.totalorder %s33, %s34
    %p48 = scmp.eq.s32.totalorder %s26, 2
    %p49 = por %p47, %p48
    %p51 = scmp.ne.s32.totalorder %s34, %s50
    %p52 = scmp.eq.s32.totalorder %s26, 0
    %p53 = por %p51, %p52
    %s54 = ssub.s32 %s20, %s27
    %p55 = scmp.eq.s32.totalorder %s54, 0
    %s57 = sadd.s32 %s56, 1
    %s58 = scalar_select %p55, %s56, %s57
    %p61 = pneg %p55
    %p62 = scmp.eq.s32.totalorder %s20, 2
    %p63 = por %p61, %p62
    %p64 = scmp.ne.s32.totalorder %s56, %s59
    %p65 = scmp.eq.s32.totalorder %s20, 0
    %p66 = por %p64, %p65
    %p67 = scmp.ne.s32.totalorder %s56, %s59
    %p68 = scmp.eq.s32.totalorder %s25, 2
    %p69 = por %p67, %p68
    %p70 = scmp.ne.s32.totalorder %s59, %s60
    %p71 = scmp.eq.s32.totalorder %s25, 0
    %p72 = por %p70, %p71
    %p73 = scmp.ne.s32.totalorder %s59, %s60
    %p74 = scmp.eq.s32.totalorder %s26, 2
    %p75 = por %p73, %p74
    %p77 = scmp.ne.s32.totalorder %s60, %s76
    %p78 = scmp.eq.s32.totalorder %s26, 0
    %p79 = por %p77, %p78
    %s80 = ssub.s32 %s20, %s27
    %p81 = scmp.eq.s32.totalorder %s80, 0
    %s83 = sadd.s32 %s82, 1
    %s84 = scalar_select %p81, %s82, %s83
    %p87 = pneg %p81
    %p88 = scmp.eq.s32.totalorder %s20, 2
    %p89 = por %p87, %p88
    %p90 = scmp.ne.s32.totalorder %s82, %s85
    %p91 = scmp.eq.s32.totalorder %s20, 0
    %p92 = por %p90, %p91
    %p93 = scmp.ne.s32.totalorder %s82, %s85
    %p94 = scmp.eq.s32.totalorder %s25, 2
    %p95 = por %p93, %p94
    %p96 = scmp.ne.s32.totalorder %s85, %s86
    %p97 = scmp.eq.s32.totalorder %s25, 0
    %p98 = por %p96, %p97
    %p99 = scmp.ne.s32.totalorder %s85, %s86
    %p100 = scmp.eq.s32.totalorder %s26, 2
    %p101 = por %p99, %p100
    %p103 = scmp.ne.s32.totalorder %s86, %s102
    %p104 = scmp.eq.s32.totalorder %s26, 0
    %p105 = por %p103, %p104
    %s106 = ssub.s32 %s20, %s27
    %p107 = scmp.eq.s32.totalorder %s106, 0
    %s109 = sadd.s32 %s108, 1
    %s110 = scalar_select %p107, %s108, %s109
    %p113 = pneg %p107
    %p114 = scmp.eq.s32.totalorder %s20, 2
    %p115 = por %p113, %p114
    %p116 = scmp.ne.s32.totalorder %s108, %s111
    %p117 = scmp.eq.s32.totalorder %s20, 0
    %p118 = por %p116, %p117
    %p119 = scmp.ne.s32.totalorder %s108, %s111
    %p120 = scmp.eq.s32.totalorder %s25, 2
    %p121 = por %p119, %p120
    %p122 = scmp.ne.s32.totalorder %s111, %s112
    %p123 = scmp.eq.s32.totalorder %s25, 0
    %p124 = por %p122, %p123
    %p125 = scmp.ne.s32.totalorder %s111, %s112
    %p126 = scmp.eq.s32.totalorder %s26, 2
    %p127 = por %p125, %p126
    %p129 = scmp.ne.s32.totalorder %s112, %s128
    %p130 = scmp.eq.s32.totalorder %s26, 0
    %p131 = por %p129, %p130
    %s132 = ssub.s32 %s20, %s27
    %p133 = scmp.eq.s32.totalorder %s132, 0
    %s135 = sadd.s32 %s134, 1
    %s136 = scalar_select %p133, %s134, %s135
    %p139 = pneg %p133
    %p140 = scmp.eq.s32.totalorder %s20, 2
    %p141 = por %p139, %p140
    %p142 = scmp.ne.s32.totalorder %s134, %s137
    %p143 = scmp.eq.s32.totalorder %s20, 0
    %p144 = por %p142, %p143
    %p145 = scmp.ne.s32.totalorder %s134, %s137
    %p146 = scmp.eq.s32.totalorder %s25, 2
    %p147 = por %p145, %p146
    %p148 = scmp.ne.s32.totalorder %s137, %s138
    %p149 = scmp.eq.s32.totalorder %s25, 0
    %p150 = por %p148, %p149
    %p151 = scmp.ne.s32.totalorder %s137, %s138
    %p152 = scmp.eq.s32.totalorder %s26, 2
    %p153 = por %p151, %p152
    %p155 = scmp.ne.s32.totalorder %s138, %s154
    %p156 = scmp.eq.s32.totalorder %s26, 0
    %p157 = por %p155, %p156
    %s158 = ssub.s32 %s20, %s27
    %p159 = scmp.eq.s32.totalorder %s158, 0
    %s161 = sadd.s32 %s160, 1
    %s162 = scalar_select %p159, %s160, %s161
    %p165 = pneg %p159
    %p166 = scmp.eq.s32.totalorder %s20, 2
    %p167 = por %p165, %p166
    %p168 = scmp.ne.s32.totalorder %s160, %s163
    %p169 = scmp.eq.s32.totalorder %s20, 0
    %p170 = por %p168, %p169
    %p171 = scmp.ne.s32.totalorder %s160, %s163
    %p172 = scmp.eq.s32.totalorder %s25, 2
    %p173 = por %p171, %p172
    %p174 = scmp.ne.s32.totalorder %s163, %s164
    %p175 = scmp.eq.s32.totalorder %s25, 0
    %p176 = por %p174, %p175
    %p177 = scmp.ne.s32.totalorder %s163, %s164
    %p178 = scmp.eq.s32.totalorder %s26, 2
    %p179 = por %p177, %p178
    %p181 = scmp.ne.s32.totalorder %s164, %s180
    %p182 = scmp.eq.s32.totalorder %s26, 0
    %p183 = por %p181, %p182
    %p184 = scmp.le.s32.totalorder 1, %s20
    %p185 = scmp.lt.s32.totalorder %s20, 4
    %p186 = pnand %p184, %p185
    %p187 = pneg %p186
    // Predicated region
    $region9: #{_slot_labels_batched.1} parent=5 // pred_check
      _
    $region10: #{_slot_labels_batched.1} parent=5 // pred_check_branch
      %189 = sbr.rel (%p186) target = $region12
    $region11: #{_slot_labels_batched.1} parent=5 // pred_region
      %s190 = ssub.s32 %s20, 1
    $region12: #{_slot_labels_batched.1} parent=5 // pred_fallthru
      _
    %p191 = scmp.lt.s32.totalorder %s20, 3
    // Predicated region
    $region13: #{_slot_labels_batched.1} parent=5 // pred_check
      %p192 = pneg %p191
    $region14: #{_slot_labels_batched.1} parent=5 // pred_check_branch
      %194 = sbr.rel (%p192) target = $region16
    $region15: #{_slot_labels_batched.1} parent=5 // pred_region
      // Predicated region
      $region17: #{_slot_labels_batched.1} parent=15 // pred_check
        %p195 = pneg %p40
      $region18: #{_slot_labels_batched.1} parent=15 // pred_check_branch
        %197 = sbr.rel (%p195) target = $region20
      $region19: #{_slot_labels_batched.1} parent=15 // pred_region
        %p198 = scmp.lt.s32.totalorder %s20, 2
        %s199 = scalar_select %p198, %s20, 2
        %s200 = scalar_lea.vmem %s1, %s199
      $region20: #{_slot_labels_batched.1} parent=15 // pred_fallthru
        _
      // Predicated region
      $region21: #{_slot_labels_batched.1} parent=15 // pred_check
        %p201 = pneg %p66
      $region22: #{_slot_labels_batched.1} parent=15 // pred_check_branch
        %203 = sbr.rel (%p201) target = $region24
      $region23: #{_slot_labels_batched.1} parent=15 // pred_region
        %p204 = scmp.lt.s32.totalorder %s20, 2
        %s205 = scalar_select %p204, %s20, 2
        %s206 = scalar_lea.vmem %s2, %s205
      $region24: #{_slot_labels_batched.1} parent=15 // pred_fallthru
        _
      // Predicated region
      $region25: #{_slot_labels_batched.1} parent=15 // pred_check
        %p207 = pneg %p92
      $region26: #{_slot_labels_batched.1} parent=15 // pred_check_branch
        %209 = sbr.rel (%p207) target = $region28
      $region27: #{_slot_labels_batched.1} parent=15 // pred_region
        %p210 = scmp.lt.s32.totalorder %s20, 2
        %s211 = scalar_select %p210, %s20, 2
        %s212 = smul.addr %s211, 8
        %s213 = scalar_lea.vmem %s3, %s212
      $region28: #{_slot_labels_batched.1} parent=15 // pred_fallthru
        _
      // Predicated region
      $region29: #{_slot_labels_batched.1} parent=15 // pred_check
        %p214 = pneg %p118
      $region30: #{_slot_labels_batched.1} parent=15 // pred_check_branch
        %216 = sbr.rel (%p214) target = $region32
      $region31: #{_slot_labels_batched.1} parent=15 // pred_region
        %p217 = scmp.lt.s32.totalorder %s20, 2
        %s218 = scalar_select %p217, %s20, 2
        %s219 = smul.addr %s218, 8
        %s220 = scalar_lea.vmem %s4, %s219
      $region32: #{_slot_labels_batched.1} parent=15 // pred_fallthru
        _
      // Predicated region
      $region33: #{_slot_labels_batched.1} parent=15 // pred_check
        %p221 = pneg %p144
      $region34: #{_slot_labels_batched.1} parent=15 // pred_check_branch
        %223 = sbr.rel (%p221) target = $region36
      $region35: #{_slot_labels_batched.1} parent=15 // pred_region
        %p224 = scmp.lt.s32.totalorder %s20, 2
        %s225 = scalar_select %p224, %s20, 2
        %s226 = smul.addr %s225, 8
        %s227 = scalar_lea.vmem %s5, %s226
      $region36: #{_slot_labels_batched.1} parent=15 // pred_fallthru
        _
    $region16: #{_slot_labels_batched.1} parent=5 // pred_fallthru
      _
    %p228 = scmp.le.s32.totalorder 1, %s20
    %p229 = scmp.lt.s32.totalorder %s20, 4
    %p230 = pnand %p228, %p229
    %p231 = pneg %p230
    // Predicated region
    $region37: #{_slot_labels_batched.1} parent=5 // pred_check
      _
    $region38: #{_slot_labels_batched.1} parent=5 // pred_check_branch
      %233 = sbr.rel (%p230) target = $region40
    $region39: #{_slot_labels_batched.1} parent=5 // pred_region
      %s234 = ssub.s32 %s20, 1
      %p235 = scmp.lt.s32.totalorder %s25, 2
      %s236 = scalar_select %p235, %s25, 2
      %s237 = scalar_lea.vmem %s1, %s236
      %p238 = pneg %p46
      %p239 = pneg %p43
      %p240 = scmp.lt.s32.totalorder %s25, 2
      %s241 = scalar_select %p240, %s25, 2
      %s242 = scalar_lea.vmem %s2, %s241
      %p243 = pneg %p72
      %p244 = pneg %p69
      %p245 = scmp.lt.s32.totalorder %s25, 2
      %s246 = scalar_select %p245, %s25, 2
      %s247 = smul.addr %s246, 8
      %s248 = scalar_lea.vmem %s3, %s247
      %p249 = pneg %p98
      %p250 = pneg %p95
      %p251 = scmp.lt.s32.totalorder %s25, 2
      %s252 = scalar_select %p251, %s25, 2
      %s253 = smul.addr %s252, 8
      %s254 = scalar_lea.vmem %s4, %s253
      %p255 = pneg %p124
      %p256 = pneg %p121
      %p257 = scmp.lt.s32.totalorder %s25, 2
      %s258 = scalar_select %p257, %s25, 2
      %s259 = smul.addr %s258, 8
      %s260 = scalar_lea.vmem %s5, %s259
      %p261 = pneg %p150
      %p262 = pneg %p147
      %p263 = pneg %p176
      %p264 = pneg %p173
      %p265 = scmp.lt.s32.totalorder %s25, 2
      %s266 = scalar_select %p265, %s25, 2
      %s267 = scalar_lea.vmem %s6, %s266
      %p268 = scmp.lt.s32.totalorder %s25, 2
      %s269 = scalar_select %p268, %s25, 2
      %s270 = scalar_lea.vmem %s1, %s269
      %p271 = scmp.lt.s32.totalorder %s25, 2
      %s272 = scalar_select %p271, %s25, 2
      %s273 = scalar_lea.vmem %s2, %s272
      %p274 = scmp.lt.s32.totalorder %s25, 2
      %s275 = scalar_select %p274, %s25, 2
      %s276 = smul.addr %s275, 8
      %s277 = scalar_lea.vmem %s3, %s276
      %p278 = scmp.lt.s32.totalorder %s25, 2
      %s279 = scalar_select %p278, %s25, 2
      %s280 = smul.addr %s279, 8
      %s281 = scalar_lea.vmem %s4, %s280
      %p282 = scmp.lt.s32.totalorder %s25, 2
      %s283 = scalar_select %p282, %s25, 2
      %s284 = smul.addr %s283, 8
      %s285 = scalar_lea.vmem %s5, %s284
      %p286 = scmp.lt.s32.totalorder %s25, 2
      %s287 = scalar_select %p286, %s25, 2
      %s288 = scalar_lea.vmem %s6, %s287
      %s289 = sld [smem:[#allocation3 + %s25]]
      %v290 = vld [vmem:[%s270] sm:$0x1]
      %v291 = vld [vmem:[%s273] sm:$0x1]
      %v292 = vld [vmem:[%s277] sm:$0xff]
      %v293 = vld [vmem:[%s281] sm:$0xff]
      %v294 = vld [vmem:[%s285] sm:$0xff]
      %v295 = vlaneseq
      %v296 = vshrl.u32 %v295, 7
      %v297 = vstv %s289
      %vm298 = vcmp.lt.s32.totalorder %v296, %v297
      %299 = vset.pattern.permute.xlu0 0
      %300 = vperm.xlu0 %299, %v293
      %v301 = vpop.permute.xlu0 %300
      %v302 = vperm.slane %v290, 0
      %vm303 = vcmp.lt.s32.totalorder %v301, %v302
      %v304 = vsel %vm298, 1, 0
      %vm305 = vcmp.eq.s32.totalorder %v304, 1
      %vm306 = vmand %vm303, %vm305
      %v307 = vsel %vm306, 1, 0
      %v308 = vrot.slane %v307, 4
      %v309 = vadd.s32 %v307, %v308
      %v310 = vrot.slane %v309, 2
      %v311 = vadd.s32 %v309, %v310
      %v312 = vrot.slane %v311, 1
      %v313 = vadd.s32 %v311, %v312
      %vm314 = vcmp.eq.s32.totalorder %v296, %v313
      %vm315 = vmand %vm314, %vm305
      %v316 = vperm.slane %v291, 0
      %317 = vset.pattern.permute.xlu0 0
      %318 = vperm.xlu0 %317, %v292
      %v319 = vpop.permute.xlu0 %318
      %vm320 = vcmp.gt.s32.totalorder %v316, %v319
      %vm321 = vmand %vm315, %vm320
      %322 = vset.pattern.permute.xlu0 0
      %323 = vperm.xlu0 %322, %v294
      %v324 = vpop.permute.xlu0 %323
      %v325 = vsel %vm321, %v324, 0
      %v326 = vrot.slane %v325, 4
      %v327 = vadd.s32 %v325, %v326
      %v328 = vrot.slane %v327, 2
      %v329 = vadd.s32 %v327, %v328
      %v330 = vrot.slane %v329, 1
      %v331 = vadd.s32 %v329, %v330
      %332 = vst [vmem:[%s288] sm:$0x1] %v331
      %p333 = scmp.lt.s32.totalorder %s25, 2
      %s334 = scalar_select %p333, %s25, 2
      %s335 = scalar_lea.vmem %s6, %s334
      // Predicated region
      $region41: #{_slot_labels_batched.1} parent=39 // pred_check
        %p336 = pneg %p173
      $region42: #{_slot_labels_batched.1} parent=39 // pred_check_branch
        %338 = sbr.rel (%p336) target = $region44
      $region43: #{_slot_labels_batched.1} parent=39 // pred_region
        _
      $region44: #{_slot_labels_batched.1} parent=39 // pred_fallthru
        _
    $region40: #{_slot_labels_batched.1} parent=5 // pred_fallthru
      _
    %p339 = scmp.le.s32.totalorder 2, %s20
    // Predicated region
    $region45: #{_slot_labels_batched.1} parent=5 // pred_check
      %p340 = pneg %p339
    $region46: #{_slot_labels_batched.1} parent=5 // pred_check_branch
      %342 = sbr.rel (%p340) target = $region48
    $region47: #{_slot_labels_batched.1} parent=5 // pred_region
      %s343 = ssub.s32 %s20, 2
      // Predicated region
      $region49: #{_slot_labels_batched.1} parent=47 // pred_check
        %p344 = pneg %p179
      $region50: #{_slot_labels_batched.1} parent=47 // pred_check_branch
        %346 = sbr.rel (%p344) target = $region52
      $region51: #{_slot_labels_batched.1} parent=47 // pred_region
        %p347 = scmp.lt.s32.totalorder %s26, 2
        %s348 = scalar_select %p347, %s26, 2
        %s349 = scalar_lea.vmem %s6, %s348
      $region52: #{_slot_labels_batched.1} parent=47 // pred_fallthru
        _
    $region48: #{_slot_labels_batched.1} parent=5 // pred_fallthru
      _
  $region6: #{_slot_labels_batched.1} parent=0 // loop_footer
    %s24 = sadd.s32 1, %s20
  $region7: #{_slot_labels_batched.1} parent=0 // loop_footer_branch
    %19 = sbr.rel target = $region3
  $region8: #{_slot_labels_batched.1} parent=0 // loop_exit
    _

</llo_original>
